<compile_context>
chip_gen: v6e
topology: v6e:2x2x1
jax: 0.10.0
libtpu: 0.0.40
codegen_flags: <defaults>
</compile_context>

<pallas_src>
import functools

import jax
import jax.numpy as jnp
from jax import lax
from jax.experimental import pallas as pl
from jax.experimental.pallas import tpu as pltpu

_LN_EPS = 1e-5  # matches torch.nn.LayerNorm default


# ---------------------------------------------------------------------------
# Kernels
# ---------------------------------------------------------------------------
def _prenorm_linear_fast_kernel(x_ref, gamma_ref, beta_ref, w_ref, b_ref,
                                o_ref):
    """Single column tile: LayerNorm feeds the MXU directly (no scratch).

    x_ref:     (tm, D)   rows of input
    gamma_ref: (1, D)    LayerNorm weight
    beta_ref:  (1, D)    LayerNorm bias
    w_ref:     (D, D)    full Linear weight
    b_ref:     (1, D)    Linear bias
    o_ref:     (tm, D)   output tile
    """
    x = x_ref[...].astype(jnp.float32)
    # One-pass statistics: var = E[x^2] - mean^2.
    mean = jnp.mean(x, axis=-1, keepdims=True)
    mean_sq = jnp.mean(x * x, axis=-1, keepdims=True)
    var = jnp.maximum(mean_sq - mean * mean, 0.0)
    xn = (x - mean) * lax.rsqrt(var + _LN_EPS)
    y = xn * gamma_ref[...].astype(jnp.float32) \
        + beta_ref[...].astype(jnp.float32)
    # Matmul in the weight's (native operand) dtype, f32 accumulation.
    y = y.astype(w_ref.dtype)
    out = jnp.dot(y, w_ref[...], preferred_element_type=jnp.float32)
    out = out + b_ref[...].astype(jnp.float32)
    o_ref[...] = out.astype(o_ref.dtype)


def _prenorm_linear_tiled_kernel(x_ref, gamma_ref, beta_ref, w_ref, b_ref,
                                 o_ref, y_ref):
    """Column-tiled path (large D): LayerNorm cached in VMEM scratch at j==0.

    x_ref:     (tm, D)   rows of input
    gamma_ref: (1, D)    LayerNorm weight
    beta_ref:  (1, D)    LayerNorm bias
    w_ref:     (D, tn)   Linear weight panel
    b_ref:     (1, tn)   Linear bias panel
    o_ref:     (tm, tn)  output tile
    y_ref:     (tm, D)   VMEM scratch holding LayerNorm(x) for this row tile
    """
    j = pl.program_id(1)

    @pl.when(j == 0)
    def _compute_layernorm():
        x = x_ref[...].astype(jnp.float32)
        mean = jnp.mean(x, axis=-1, keepdims=True)
        mean_sq = jnp.mean(x * x, axis=-1, keepdims=True)
        var = jnp.maximum(mean_sq - mean * mean, 0.0)
        xn = (x - mean) * lax.rsqrt(var + _LN_EPS)
        y = xn * gamma_ref[...].astype(jnp.float32) \
            + beta_ref[...].astype(jnp.float32)
        # Stored in the matmul operand dtype so the MXU runs at operand peak.
        y_ref[...] = y.astype(y_ref.dtype)

    out = jnp.dot(y_ref[...], w_ref[...], preferred_element_type=jnp.float32)
    out = out + b_ref[...].astype(jnp.float32)
    o_ref[...] = out.astype(o_ref.dtype)


# ---------------------------------------------------------------------------
# Host-side tiling / budgeting helpers
# ---------------------------------------------------------------------------
def _round_up(x, m):
    return ((x + m - 1) // m) * m


def _vmem_capacity_bytes():
    """Physical per-core VMEM (trace-time query), conservative fallback."""
    try:
        info = pltpu.get_tpu_info()
        cap = getattr(info, "vmem_capacity_bytes", None)
        if cap:
            return int(cap)
    except Exception:
        pass
    return 64 * 1024 * 1024  # v7x per-TC VMEM; safe lower bound


def _pick_tn(D, w_itemsize, full_w_threshold):
    """Full-width weight panel unless W is big enough to threaten VMEM."""
    if D * D * w_itemsize <= full_w_threshold:
        return D
    for cand in (1024, 512, 256, 128):
        if D % cand == 0:
            return cand
    # TODO(synk): irregular large D (not a multiple of 128) falls back to a
    # full-width W panel; a padded-tn path would be needed to bound VMEM here.
    return D


def _vmem_need(tm, D, tn, multi_col, x_isz, o_isz, w_isz, y_isz):
    need = 2 * tm * D * x_isz         # double-buffered x row tiles
    need += 2 * tm * tn * o_isz       # double-buffered output tiles
    need += 2 * D * tn * w_isz        # double-buffered W panel
    need += 3 * tm * D * 4            # f32 LayerNorm temporaries
    if multi_col:
        need += tm * D * y_isz        # cached LayerNorm scratch
    need += 16 * D * 4                # gamma / beta / bias panels + slack
    return need


def _auto_tm(M_rows, D, tn, multi_col, itemsizes, vmem_cap, big_vmem, tm_req):
    m_cap = _round_up(M_rows, 8)
    if tm_req is not None:
        return min(_round_up(tm_req, 8), m_cap)
    # In the weight-re-streaming (multi-column) regime the W panel is
    # re-fetched per row tile, so larger tm directly raises arithmetic
    # intensity; single-column small-D cases don't need huge tiles.
    tm_max = (1024 if big_vmem else 384) if multi_col else 512
    for cand in (1024, 768, 512, 384, 256, 128, 64, 32, 16, 8):
        if cand > tm_max:
            continue
        tm = min(cand, m_cap)
        if _vmem_need(tm, D, tn, multi_col, *itemsizes) <= vmem_cap:
            return tm
    return min(8, m_cap)


# ---------------------------------------------------------------------------
# Wrapper
# ---------------------------------------------------------------------------
@functools.partial(jax.jit, static_argnames=("tm", "use_bf16_matmul"))
def prenorm_linear(x, gamma, beta, w, b, *, tm=None, use_bf16_matmul=False):
    """x: (B, S, D) -> (B, S, D).  Computes Linear(LayerNorm(x))."""
    B, S, D = x.shape
    M = B * S

    # --- generation-aware budgets -----------------------------------------
    phys_vmem = _vmem_capacity_bytes()
    big_vmem = phys_vmem >= 128 * 1024 * 1024
    if big_vmem:                     # v5e / v6e: 128 MiB physical
        vmem_cap = 100 * 1024 * 1024
        full_w_threshold = 16 * 1024 * 1024
    else:                            # v7x: 64 MiB per TC; leave headroom
        vmem_cap = 52 * 1024 * 1024
        full_w_threshold = 8 * 1024 * 1024

    # --- dtypes -------------------------------------------------------------
    x_isz = jnp.dtype(x.dtype).itemsize
    o_isz = x_isz
    mm_dtype = jnp.bfloat16 if use_bf16_matmul else w.dtype
    w_eff = w.astype(mm_dtype)
    w_isz = jnp.dtype(mm_dtype).itemsize
    y_isz = w_isz

    # --- tiling -------------------------------------------------------------
    tn = _pick_tn(D, w_isz, full_w_threshold)
    n_col_tiles = D // tn
    multi_col = n_col_tiles > 1

    itemsizes = (x_isz, o_isz, w_isz, y_isz)
    tm_eff = _auto_tm(M, D, tn, multi_col, itemsizes, vmem_cap, big_vmem, tm)
    M_pad = _round_up(M, tm_eff)
    n_row_tiles = M_pad // tm_eff

    x2 = x.reshape(M, D)
    if M_pad != M:
        x2 = jnp.pad(x2, ((0, M_pad - M), (0, 0)))
    gamma2 = gamma.reshape(1, D)
    beta2 = beta.reshape(1, D)
    b2 = b.reshape(1, D)

    need = _vmem_need(tm_eff, D, tn, multi_col, *itemsizes)
    vmem_limit = min(vmem_cap, max(32 * 1024 * 1024, int(need * 1.25)))

    # W is re-streamed once per row tile when the column axis is tiled.
    w_stream = (n_row_tiles if multi_col else 1) * D * D * w_isz
    cost = pl.CostEstimate(
        flops=2 * M_pad * D * D,
        transcendentals=M_pad,                        # one rsqrt per row
        bytes_accessed=(M_pad * D * x_isz             # x read
                        + M_pad * D * o_isz           # output write
                        + w_stream                    # weight traffic
                        + 3 * D * 4),                 # gamma / beta / bias
    )

    if not multi_col:
        # ---- fast path: single column tile, no LN scratch ------------------
        out2 = pl.pallas_call(
            _prenorm_linear_fast_kernel,
            out_shape=jax.ShapeDtypeStruct((M_pad, D), x.dtype),
            grid_spec=pltpu.PrefetchScalarGridSpec(
                num_scalar_prefetch=0,
                grid=(n_row_tiles,),
                in_specs=[
                    pl.BlockSpec((tm_eff, D), lambda i: (i, 0)),  # x rows
                    pl.BlockSpec((1, D), lambda i: (0, 0)),       # gamma
                    pl.BlockSpec((1, D), lambda i: (0, 0)),       # beta
                    pl.BlockSpec((D, D), lambda i: (0, 0)),       # W (full)
                    pl.BlockSpec((1, D), lambda i: (0, 0)),       # bias
                ],
                out_specs=pl.BlockSpec((tm_eff, D), lambda i: (i, 0)),
                scratch_shapes=[],
            ),
            compiler_params=pltpu.CompilerParams(
                dimension_semantics=("parallel",),
                vmem_limit_bytes=vmem_limit,
            ),
            cost_estimate=cost,
        )(x2, gamma2, beta2, w_eff, b2)
    else:
        # ---- column-tiled path: LN cached in VMEM scratch -------------------
        out2 = pl.pallas_call(
            _prenorm_linear_tiled_kernel,
            out_shape=jax.ShapeDtypeStruct((M_pad, D), x.dtype),
            grid_spec=pltpu.PrefetchScalarGridSpec(
                num_scalar_prefetch=0,
                grid=(n_row_tiles, n_col_tiles),
                in_specs=[
                    pl.BlockSpec((tm_eff, D), lambda i, j: (i, 0)),  # x rows
                    pl.BlockSpec((1, D), lambda i, j: (0, 0)),       # gamma
                    pl.BlockSpec((1, D), lambda i, j: (0, 0)),       # beta
                    pl.BlockSpec((D, tn), lambda i, j: (0, j)),      # W panel
                    pl.BlockSpec((1, tn), lambda i, j: (0, j)),      # bias
                ],
                out_specs=pl.BlockSpec((tm_eff, tn), lambda i, j: (i, j)),
                scratch_shapes=[pltpu.VMEM((tm_eff, D), mm_dtype)],
            ),
            compiler_params=pltpu.CompilerParams(
                # Rows are embarrassingly parallel (megacore); the column axis
                # reuses the per-core LN scratch, so it stays sequential.
                dimension_semantics=("parallel", "arbitrary"),
                vmem_limit_bytes=vmem_limit,
            ),
            cost_estimate=cost,
        )(x2, gamma2, beta2, w_eff, b2)

    return out2[:M].reshape(B, S, D)


# ---------------------------------------------------------------------------
# Reference + self-test
# ---------------------------------------------------------------------------
def reference(x, gamma, beta, w, b):
    xf = x.astype(jnp.float32)
    mean = jnp.mean(xf, axis=-1, keepdims=True)
    var = jnp.mean((xf - mean) ** 2, axis=-1, keepdims=True)
    xn = (xf - mean) * lax.rsqrt(var + _LN_EPS)
    y = xn * gamma.astype(jnp.float32) + beta.astype(jnp.float32)
    out = y @ w.astype(jnp.float32) + b.astype(jnp.float32)
    return out.astype(x.dtype)


if __name__ == "__main__":
    # Small shapes consistent with PreNorm's (B, S, D) usage.
    B, S, D = 2, 8, 32
    key = jax.random.PRNGKey(0)
    kx, kw, kb = jax.random.split(key, 3)

    x = jax.random.normal(kx, (B, S, D), dtype=jnp.float32)

    # Deterministic parameter init:
    #   LayerNorm: weight=1, bias=0 (PyTorch default init)
    gamma = jnp.ones((D,), jnp.float32)
    beta = jnp.zeros((D,), jnp.float32)
    #   fn = Linear(D, D): small deterministic random weights
    w = jax.random.normal(kw, (D, D), dtype=jnp.float32) * 0.05
    b = jax.random.normal(kb, (D,), dtype=jnp.float32) * 0.05

    out = prenorm_linear(x, gamma, beta, w, b)
    out = jax.block_until_ready(out)

    ref = reference(x, gamma, beta, w, b)
    assert out.shape == (B, S, D)
    assert jnp.allclose(out, ref, atol=1e-4, rtol=1e-4), "mismatch vs reference"

    # TODO(synk): the PyTorch module wraps an arbitrary `fn`; only Linear(dim, dim)
    # is fused here. Other `fn` choices need their own kernels.

    print("KERNEL_OK")
</pallas_src>

<mosaic_0001>
module attributes {stable_mosaic.version = 11 : i64} {
  func.func @_prenorm_linear_fast_kernel(%arg0: i32, %arg1: memref<16x32xf32, #tpu.memory_space<vmem>>, %arg2: memref<1x32xf32, #tpu.memory_space<vmem>>, %arg3: memref<1x32xf32, #tpu.memory_space<vmem>>, %arg4: memref<32x32xf32, #tpu.memory_space<vmem>>, %arg5: memref<1x32xf32, #tpu.memory_space<vmem>>, %arg6: memref<16x32xf32, #tpu.memory_space<vmem>>) attributes {dimension_semantics = [#tpu.dimension_semantics<parallel>], iteration_bounds = array<i64: 1>, scalar_prefetch = 0 : i64, scratch_operands = 0 : i64, tpu.core_type = #tpu.core_type<tc>, window_params = [{transform_indices = @transform_0, window_bounds = array<i64: 16, 32>}, {pipeline_mode = #tpu.pipeline_mode<synchronous>, transform_indices = @transform_1, window_bounds = array<i64: 1, 32>}, {pipeline_mode = #tpu.pipeline_mode<synchronous>, transform_indices = @transform_2, window_bounds = array<i64: 1, 32>}, {pipeline_mode = #tpu.pipeline_mode<synchronous>, transform_indices = @transform_3, window_bounds = array<i64: 32, 32>}, {pipeline_mode = #tpu.pipeline_mode<synchronous>, transform_indices = @transform_4, window_bounds = array<i64: 1, 32>}, {transform_indices = @transform_5, window_bounds = array<i64: 16, 32>}]} {
    %c0 = arith.constant 0 : index
    %c0_0 = arith.constant 0 : index
    %0 = vector.load %arg1[%c0, %c0_0] : memref<16x32xf32, #tpu.memory_space<vmem>>, vector<16x32xf32>
    %cst = arith.constant dense<0.000000e+00> : vector<16xf32>
    %1 = vector.multi_reduction <add>, %0, %cst [1] : vector<16x32xf32> to vector<16xf32>
    %2 = vector.shape_cast %1 : vector<16xf32> to vector<16x1xf32>
    %cst_1 = arith.constant 3.200000e+01 : f32
    %3 = vector.broadcast %cst_1 : f32 to vector<16x1xf32>
    %4 = arith.divf %2, %3 : vector<16x1xf32>
    %5 = arith.mulf %0, %0 : vector<16x32xf32>
    %cst_2 = arith.constant dense<0.000000e+00> : vector<16xf32>
    %6 = vector.multi_reduction <add>, %5, %cst_2 [1] : vector<16x32xf32> to vector<16xf32>
    %7 = vector.shape_cast %6 : vector<16xf32> to vector<16x1xf32>
    %cst_3 = arith.constant 3.200000e+01 : f32
    %8 = vector.broadcast %cst_3 : f32 to vector<16x1xf32>
    %9 = arith.divf %7, %8 : vector<16x1xf32>
    %10 = arith.mulf %4, %4 : vector<16x1xf32>
    %11 = arith.subf %9, %10 : vector<16x1xf32>
    %cst_4 = arith.constant 0.000000e+00 : f32
    %12 = vector.broadcast %cst_4 : f32 to vector<16x1xf32>
    %13 = arith.maximumf %11, %12 : vector<16x1xf32>
    %14 = vector.broadcast %4 : vector<16x1xf32> to vector<16x32xf32>
    %15 = arith.subf %0, %14 : vector<16x32xf32>
    %cst_5 = arith.constant 9.99999974E-6 : f32
    %16 = vector.broadcast %cst_5 : f32 to vector<16x1xf32>
    %17 = arith.addf %13, %16 : vector<16x1xf32>
    %18 = math.rsqrt %17 : vector<16x1xf32>
    %19 = vector.broadcast %18 : vector<16x1xf32> to vector<16x32xf32>
    %20 = arith.mulf %15, %19 : vector<16x32xf32>
    %c0_6 = arith.constant 0 : index
    %c0_7 = arith.constant 0 : index
    %21 = vector.load %arg2[%c0_6, %c0_7] : memref<1x32xf32, #tpu.memory_space<vmem>>, vector<1x32xf32>
    %22 = vector.broadcast %21 : vector<1x32xf32> to vector<16x32xf32>
    %23 = arith.mulf %20, %22 : vector<16x32xf32>
    %c0_8 = arith.constant 0 : index
    %c0_9 = arith.constant 0 : index
    %24 = vector.load %arg3[%c0_8, %c0_9] : memref<1x32xf32, #tpu.memory_space<vmem>>, vector<1x32xf32>
    %25 = vector.broadcast %24 : vector<1x32xf32> to vector<16x32xf32>
    %26 = arith.addf %23, %25 : vector<16x32xf32>
    %c0_10 = arith.constant 0 : index
    %c0_11 = arith.constant 0 : index
    %27 = vector.load %arg4[%c0_10, %c0_11] : memref<32x32xf32, #tpu.memory_space<vmem>>, vector<32x32xf32>
    %cst_12 = arith.constant dense<0.000000e+00> : vector<16x32xf32>
    %28 = tpu.matmul %26, %27, %cst_12 {dimension_numbers = #tpu.dot_dimension_numbers<[1], [0], [0], [1], [0, 0, 1, 1], [], []>} : vector<16x32xf32>, vector<32x32xf32>, vector<16x32xf32> -> vector<16x32xf32>
    %c0_13 = arith.constant 0 : index
    %c0_14 = arith.constant 0 : index
    %29 = vector.load %arg5[%c0_13, %c0_14] : memref<1x32xf32, #tpu.memory_space<vmem>>, vector<1x32xf32>
    %30 = vector.broadcast %29 : vector<1x32xf32> to vector<16x32xf32>
    %31 = arith.addf %28, %30 : vector<16x32xf32>
    %c0_15 = arith.constant 0 : index
    %c0_16 = arith.constant 0 : index
    %32 = vector.load %arg6[%c0_15, %c0_16] : memref<16x32xf32, #tpu.memory_space<vmem>>, vector<16x32xf32>
    tpu.vector_store %arg6[%c0_15, %c0_16], %31 {strides = array<i32>} : memref<16x32xf32, #tpu.memory_space<vmem>>, vector<16x32xf32>,
    return
  }
  func.func @transform_0(%arg0: i32) -> (i32, i32) {
    %c0_i32 = arith.constant 0 : i32
    %c0_i32_0 = arith.constant 0 : i32
    return %arg0, %c0_i32 : i32, i32
  }
  func.func @transform_1(%arg0: i32) -> (i32, i32) {
    %c0_i32 = arith.constant 0 : i32
    %c0_i32_0 = arith.constant 0 : i32
    %c0_i32_1 = arith.constant 0 : i32
    return %c0_i32, %c0_i32_0 : i32, i32
  }
  func.func @transform_2(%arg0: i32) -> (i32, i32) {
    %c0_i32 = arith.constant 0 : i32
    %c0_i32_0 = arith.constant 0 : i32
    %c0_i32_1 = arith.constant 0 : i32
    return %c0_i32, %c0_i32_0 : i32, i32
  }
  func.func @transform_3(%arg0: i32) -> (i32, i32) {
    %c0_i32 = arith.constant 0 : i32
    %c0_i32_0 = arith.constant 0 : i32
    %c0_i32_1 = arith.constant 0 : i32
    return %c0_i32, %c0_i32_0 : i32, i32
  }
  func.func @transform_4(%arg0: i32) -> (i32, i32) {
    %c0_i32 = arith.constant 0 : i32
    %c0_i32_0 = arith.constant 0 : i32
    %c0_i32_1 = arith.constant 0 : i32
    return %c0_i32, %c0_i32_0 : i32, i32
  }
  func.func @transform_5(%arg0: i32) -> (i32, i32) {
    %c0_i32 = arith.constant 0 : i32
    %c0_i32_0 = arith.constant 0 : i32
    return %arg0, %c0_i32 : i32, i32
  }
}

</mosaic_0001>

<llo_original>
// kernel: prenorm_linear.1
$region0: #{prenorm_linear.1}
  #allocation0 [shape = 'u32[]', space=smem, size = 0x4, offset = 0x4, fixed_abs, tag = 'smem constant byte address 0x4 - core index']
  #allocation1 [shape = 'u32[144,128]{1,0:T(1,128)}', space=vmem, size = 0x12000, scoped, tag = 'internal scratch']
  %s0 = inlined_call_operand.hbm [shape: f32[16,32], index: 0, kind: input, shape index: {}]
  %s1 = inlined_call_operand.vmem [shape: f32[1,32], index: 1, kind: input, shape index: {}]
  %s2 = inlined_call_operand.vmem [shape: f32[1,32], index: 2, kind: input, shape index: {}]
  %s3 = inlined_call_operand.hbm [shape: f32[32,32], index: 3, kind: input, shape index: {}]
  %s4 = inlined_call_operand.vmem [shape: f32[1,32], index: 4, kind: input, shape index: {}]
  %s5 = inlined_call_operand.hbm [shape: f32[16,32], index: 5, kind: output, shape index: {}]
  %s6 = sld [smem:[#allocation0]]
  $region38: #{prenorm_linear.1} parent=0
    _
  %s8 = ssub.s32 1, %s6
  %s9 = scalar_select 0, %s8, %s6
  $region1: #{prenorm_linear.1} parent=0
    #allocation2 [shape = 'u8[8192]{0}', space=vmem, size = 0x2000, scoped, tag = 'input window, operand 0, single buffered']
    #allocation3 [shape = 's32[1]{0}', space=sflag, size = 0x4, scoped, tag = 'scoped memory for prenorm_linear.1']
    #allocation4 [shape = 's32[1]{0}', space=sflag, size = 0x4, scoped, tag = 'scoped memory for prenorm_linear.1']
    #allocation5 [shape = 'u8[16384]{0}', space=vmem, size = 0x4000, scoped, tag = 'input window, operand 3, single buffered']
    #allocation6 [shape = 's32[1]{0}', space=sflag, size = 0x4, scoped, tag = 'scoped memory for prenorm_linear.1']
    #allocation7 [shape = 'u8[8192]{0}', space=vmem, size = 0x2000, scoped, tag = 'output window, operand 0, single buffered']
    %10 = vsyncpa [#allocation3], 0
    %11 = vsyncpa [#allocation6], 0
    %12 = vsyncpa [#allocation4], 0
    // Predicated region
    $region2: #{prenorm_linear.1} parent=1 // pred_check
      _
    $region3: #{prenorm_linear.1} parent=1 // pred_check_branch
      %14 = sbr.rel (0) target = $region5
    $region4: #{prenorm_linear.1} parent=1 // pred_region
      %s16 = ssub.s32 256, 256
      %17 = vsyncadd [#allocation3], %s16
      %s18 = sshll.u32 [#allocation2], 4
      %s19 = int_to_ptr.vmem [resolvable:$true] %s18
      %24 = dma.hbm_to_vmem [thread:$0]  %s0, 256, %s19, [#allocation3], 128, 128, 8
    $region5: #{prenorm_linear.1} parent=1 // pred_fallthru
      _
    // Predicated region
    $region6: #{prenorm_linear.1} parent=1 // pred_check
      _
    $region7: #{prenorm_linear.1} parent=1 // pred_check_branch
      %26 = sbr.rel (0) target = $region9
    $region8: #{prenorm_linear.1} parent=1 // pred_region
      _
    $region9: #{prenorm_linear.1} parent=1 // pred_fallthru
      _
    // Predicated region
    $region10: #{prenorm_linear.1} parent=1 // pred_check
      _
    $region11: #{prenorm_linear.1} parent=1 // pred_check_branch
      %28 = sbr.rel (0) target = $region13
    $region12: #{prenorm_linear.1} parent=1 // pred_region
      _
    $region13: #{prenorm_linear.1} parent=1 // pred_fallthru
      _
    // Predicated region
    $region14: #{prenorm_linear.1} parent=1 // pred_check
      _
    $region15: #{prenorm_linear.1} parent=1 // pred_check_branch
      %30 = sbr.rel (0) target = $region17
    $region16: #{prenorm_linear.1} parent=1 // pred_region
      %s32 = ssub.s32 512, 512
      %33 = vsyncadd [#allocation6], %s32
      %s34 = sshll.u32 [#allocation5], 4
      %s35 = int_to_ptr.vmem [resolvable:$true] %s34
      %40 = dma.hbm_to_vmem [thread:$0]  %s3, 512, %s35, [#allocation6], 128, 128, 8
    $region17: #{prenorm_linear.1} parent=1 // pred_fallthru
      _
    // Predicated region
    $region18: #{prenorm_linear.1} parent=1 // pred_check
      _
    $region19: #{prenorm_linear.1} parent=1 // pred_check_branch
      %42 = sbr.rel (0) target = $region21
    $region20: #{prenorm_linear.1} parent=1 // pred_region
      _
    $region21: #{prenorm_linear.1} parent=1 // pred_fallthru
      _
    // Predicated region
    $region22: #{prenorm_linear.1} parent=1 // pred_check
      _
    $region23: #{prenorm_linear.1} parent=1 // pred_check_branch
      %44 = sbr.rel (0) target = $region25
    $region24: #{prenorm_linear.1} parent=1 // pred_region
      %45 = dma.done [#allocation3], 256
    $region25: #{prenorm_linear.1} parent=1 // pred_fallthru
      _
    // Predicated region
    $region26: #{prenorm_linear.1} parent=1 // pred_check
      _
    $region27: #{prenorm_linear.1} parent=1 // pred_check_branch
      %47 = sbr.rel (0) target = $region29
    $region28: #{prenorm_linear.1} parent=1 // pred_region
      %48 = dma.done [#allocation6], 512
    $region29: #{prenorm_linear.1} parent=1 // pred_fallthru
      _
    %v49 = vld [vmem:[#allocation2] sm:$0xff]
    %v50 = vld [vmem:[#allocation2 + $0x8] sm:$0xff]
    %vm51 = vcmask 261120
    %v52 = vsel %vm51, %v49, 0.0
    %53 = vadd.xlane.f32.xlu0 %v52
    %v54 = vpop.xlane.xlu0 %53
    %v55 = vsel %vm51, %v50, 0.0
    %56 = vadd.xlane.f32.xlu0 %v55
    %v57 = vpop.xlane.xlu0 %56
    %v58 = vrcp.pop 32.0
    %v59 = vmul.f32 %v54, %v58
    %v60 = vmul.f32 %v57, %v58
    %v61 = vmul.f32 %v49, %v49
    %v62 = vmul.f32 %v50, %v50
    %v63 = vsel %vm51, %v61, 0.0
    %64 = vadd.xlane.f32.xlu0 %v63
    %v65 = vpop.xlane.xlu0 %64
    %v66 = vsel %vm51, %v62, 0.0
    %67 = vadd.xlane.f32.xlu0 %v66
    %v68 = vpop.xlane.xlu0 %67
    %v69 = vmul.f32 %v65, %v58
    %v70 = vmul.f32 %v68, %v58
    %v71 = vmul.f32 %v59, %v59
    %v72 = vmul.f32 %v60, %v60
    %v73 = vsub.f32 %v69, %v71
    %v74 = vsub.f32 %v70, %v72
    %v75 = vmax.f32 %v73, 0.0
    %v76 = vmax.f32 %v74, 0.0
    %v77 = vsub.f32 %v49, %v59
    %v78 = vsub.f32 %v50, %v60
    %v79 = vadd.f32 %v75, 1e-05
    %v80 = vadd.f32 %v76, 1e-05
    %v81 = vrsqrt.pop %v79
    %v82 = vrsqrt.pop %v80
    %v83 = vmul.f32 %v77, %v81
    %v84 = vmul.f32 %v78, %v82
    %v85 = vld [vmem:[%s1] sm:$0x1]
    %v87 = vlaneseq
    %v88 = vshrl.u32 %v87, 7
    %v89 = vsub.s32 0, %v88
    %v90 = vrot.slane %v85, %v89
    %v92 = vmul.f32 %v83, %v90
    %v93 = vmul.f32 %v84, %v90
    %v94 = vld [vmem:[%s2] sm:$0x1]
    %v96 = vlaneseq
    %v97 = vshrl.u32 %v96, 7
    %v98 = vsub.s32 0, %v97
    %v99 = vrot.slane %v94, %v98
    %v101 = vadd.f32 %v92, %v99
    %v102 = vadd.f32 %v93, %v99
    %v103 = vld [vmem:[#allocation5] sm:$0xff]
    %v104 = vld [vmem:[#allocation5 + $0x8] sm:$0xff]
    %v105 = vld [vmem:[#allocation5 + $0x10] sm:$0xff]
    %v106 = vld [vmem:[#allocation5 + $0x18] sm:$0xff]
    %v107 = vld [vmem:[%s4] sm:$0x1]
    %v109 = vlaneseq
    %v110 = vshrl.u32 %v109, 7
    %v111 = vsub.s32 0, %v110
    %v112 = vrot.slane %v107, %v111
    %v115 = vsel %vm51, %v101, 0
    %v118 = vsel %vm51, %v102, 0
    %120 = vmatprep.subr.mxu0 0.0
    %121 = vmatpush1.msra.mxu0 0.0
    %122 = vmatprep.subr.mxu0 0.0
    %123 = vmatpush1.msra.mxu0 0.0
    %124 = vmatprep.subr.mxu0 0.0
    %125 = vmatpush1.msra.mxu0 0.0
    %126 = vmatprep.subr.mxu0 0.0
    %127 = vmatpush1.msra.mxu0 0.0
    %128 = vmatprep.subr.mxu0 0.0
    %129 = vmatpush1.msra.mxu0 0.0
    %130 = vmatprep.subr.mxu0 0.0
    %131 = vmatpush1.msra.mxu0 0.0
    %132 = vmatprep.subr.mxu0 0.0
    %133 = vmatpush1.msra.mxu0 0.0
    %134 = vmatprep.subr.mxu0 0.0
    %135 = vmatpush1.msra.mxu0 0.0
    %136 = vmatprep.subr.mxu0 0.0
    %137 = vmatpush1.msra.mxu0 0.0
    %138 = vmatprep.subr.mxu0 0.0
    %139 = vmatpush1.msra.mxu0 0.0
    %140 = vmatprep.subr.mxu0 0.0
    %141 = vmatpush1.msra.mxu0 0.0
    %142 = vmatprep.subr.mxu0 0.0
    %143 = vmatpush1.msra.mxu0 0.0
    %144 = vmatprep.subr.mxu0 0.0
    %145 = vmatpush1.msra.mxu0 %v106
    %146 = vmatprep.subr.mxu0 0.0
    %147 = vmatpush1.msra.mxu0 %v105
    %148 = vmatprep.subr.mxu0 0.0
    %149 = vmatpush1.msra.mxu0 %v104
    %150 = vmatprep.subr.mxu0 0.0
    %151 = vmatpush1.msra.mxu0 %v103
    %152 = vmatprep.subr.mxu0 0.0
    %153 = vmatpush2.msra.mxu0 0.0
    %154 = vmatprep.subr.mxu0 0.0
    %155 = vmatpush2.msra.mxu0 0.0
    %156 = vmatprep.subr.mxu0 0.0
    %157 = vmatpush2.msra.mxu0 0.0
    %158 = vmatprep.subr.mxu0 0.0
    %159 = vmatpush2.msra.mxu0 0.0
    %160 = vmatprep.subr.mxu0 0.0
    %161 = vmatpush2.msra.mxu0 0.0
    %162 = vmatprep.subr.mxu0 0.0
    %163 = vmatpush2.msra.mxu0 0.0
    %164 = vmatprep.subr.mxu0 0.0
    %165 = vmatpush2.msra.mxu0 0.0
    %166 = vmatprep.subr.mxu0 0.0
    %167 = vmatpush2.msra.mxu0 0.0
    %168 = vmatprep.subr.mxu0 0.0
    %169 = vmatpush2.msra.mxu0 0.0
    %170 = vmatprep.subr.mxu0 0.0
    %171 = vmatpush2.msra.mxu0 0.0
    %172 = vmatprep.subr.mxu0 0.0
    %173 = vmatpush2.msra.mxu0 0.0
    %174 = vmatprep.subr.mxu0 0.0
    %175 = vmatpush2.msra.mxu0 0.0
    %176 = vmatprep.subr.mxu0 0.0
    %177 = vmatpush2.msra.mxu0 0.0
    %178 = vmatprep.subr.mxu0 0.0
    %179 = vmatpush2.msra.mxu0 0.0
    %180 = vmatprep.subr.mxu0 0.0
    %181 = vmatpush2.msra.mxu0 0.0
    %182 = vmatprep.subr.mxu0 0.0
    %183 = vmatpush2.msra.mxu0 0.0
    %184 = vmatprep.mubr.f32.mxu0 0.0
    %185 = vmatmul.mubr.f32.gmra.mxu0 %v115
    %v186 = vpop.f32.mrf.mxu0
    %v187 = vadd.f32 %v112, %v186
    %v188 = vpop.f32.mrf.mxu0
    %189 = vmatprep.mubr.f32.mxu0 0.0
    %190 = vmatmul.mubr.f32.gmra.mxu0 %v118
    %v191 = vpop.f32.mrf.mxu0
    %v192 = vadd.f32 %v112, %v191
    %v193 = vpop.f32.mrf.mxu0
    %194 = vdwg.mxu0
    %195 = vst.msk [vmem:[#allocation7] sm:$0xff] %vm51, %v187
    %196 = vst.msk [vmem:[#allocation7 + $0x8] sm:$0xff] %vm51, %v192
    // Predicated region
    $region30: #{prenorm_linear.1} parent=1 // pred_check
      _
    $region31: #{prenorm_linear.1} parent=1 // pred_check_branch
      %198 = sbr.rel (0) target = $region33
    $region32: #{prenorm_linear.1} parent=1 // pred_region
      %s200 = ssub.s32 256, 256
      %201 = vsyncadd [#allocation4], %s200
      %s202 = sshll.u32 [#allocation7], 4
      %s203 = int_to_ptr.vmem [resolvable:$true] %s202
      %208 = dma.vmem_to_hbm [thread:$0]  %s203, 256, %s5, [#allocation4], 128, 128, 8
    $region33: #{prenorm_linear.1} parent=1 // pred_fallthru
      _
    // Predicated region
    $region34: #{prenorm_linear.1} parent=1 // pred_check
      _
    $region35: #{prenorm_linear.1} parent=1 // pred_check_branch
      %210 = sbr.rel (0) target = $region37
    $region36: #{prenorm_linear.1} parent=1 // pred_region
      %211 = dma.done [#allocation4], 256
    $region37: #{prenorm_linear.1} parent=1 // pred_fallthru
      _
    %212 = vsyncpa [#allocation3], 1
    %213 = vsyncpa [#allocation6], 1
    %214 = vsyncpa [#allocation4], 1

</llo_original>
